<compile_context>
chip_gen: v6e
topology: v6e:2x2x1
jax: 0.10.0
libtpu: 0.0.40
codegen_flags: <defaults>
</compile_context>

<pallas_src>
import functools
import math

import jax
import jax.numpy as jnp
from jax.experimental import pallas as pl
from jax.experimental.pallas import tpu as pltpu

_LANE = 128
_SUBLANE = 16                       # covers both f32 (8) and bf16 (16) packing
_VMEM_LIMIT = 48 * 1024 * 1024      # <= v7x 64 MiB physical, > 32 MiB scoped default
_FUSE_Q_WEIGHT_LIMIT = 8 * 1024 * 1024  # fuse Q proj only if wq tile fits comfortably
_NEG_BIG = -1e30                    # finite mask value (avoids exp(-inf - -inf) NaN)


def _round_up(x, m):
    return (x + m - 1) // m * m


def _pick_tile(seq_len, preferred, minimum=128, max_waste=0.10):
    """Largest power-of-two tile <= preferred keeping padding waste <= max_waste."""
    if seq_len <= minimum:
        return _round_up(seq_len, _SUBLANE)
    best = minimum
    t = minimum * 2
    while t <= preferred:
        if _round_up(seq_len, t) - seq_len <= max_waste * seq_len:
            best = t
        t *= 2
    return best


def _pick_feature_tile(d):
    for t in (512, 256, 128):
        if d % t == 0:
            return t
    return d


# --------------------------------------------------------------------------- #
# Linear projection kernel: y = x @ W + b, tiled over (batch, seq, Dout).
# --------------------------------------------------------------------------- #
def _linear_kernel(x_ref, w_ref, b_ref, o_ref, *, compute_dtype):
    x = x_ref[...].astype(compute_dtype)                       # (ts, Dm)
    acc = jnp.dot(x, w_ref[...], preferred_element_type=jnp.float32)
    o_ref[...] = (acc + b_ref[...]).astype(o_ref.dtype)


def _linear(x, w, b, *, seq_tile, out_dtype, compute_dtype):
    # TODO(synk): for extremely large Dm, also tile Dm with an f32 accumulator.
    B, S, Dm = x.shape
    Dout = w.shape[1]
    tn = _pick_feature_tile(Dout)
    kernel = functools.partial(_linear_kernel, compute_dtype=compute_dtype)
    return pl.pallas_call(
        kernel,
        out_shape=jax.ShapeDtypeStruct((B, S, Dout), out_dtype),
        grid_spec=pltpu.PrefetchScalarGridSpec(
            num_scalar_prefetch=0,
            grid=(B, S // seq_tile, Dout // tn),
            in_specs=[
                pl.BlockSpec((None, seq_tile, Dm), lambda bi, si, ji: (bi, si, 0)),
                pl.BlockSpec((Dm, tn), lambda bi, si, ji: (0, ji)),
                pl.BlockSpec((1, tn), lambda bi, si, ji: (0, ji)),
            ],
            out_specs=pl.BlockSpec((None, seq_tile, tn),
                                   lambda bi, si, ji: (bi, si, ji)),
        ),
        compiler_params=pltpu.CompilerParams(
            dimension_semantics=("parallel", "parallel", "parallel"),
            vmem_limit_bytes=_VMEM_LIMIT,
        ),
    )(x, w, b)


# --------------------------------------------------------------------------- #
# Flash-style attention kernel with online softmax (optionally fused Q proj).
# --------------------------------------------------------------------------- #
def _flash_kernel(*refs, fused_q, has_kv_mask, compute_dtype):
    if fused_q:
        xq_ref, wq_ref, bq_ref, k_ref, v_ref, *rest = refs
    else:
        q_in_ref, k_ref, v_ref, *rest = refs
    if has_kv_mask:
        mask_ref, *rest = rest
    o_ref, *scratch = rest
    if fused_q:
        qt_sc, m_sc, l_sc, acc_sc = scratch
    else:
        m_sc, l_sc, acc_sc = scratch

    ki = pl.program_id(1)

    @pl.when(ki == 0)
    def _init():
        if fused_q:
            # Project this query tile exactly once; scale/bias already folded
            # into wq/bq by the wrapper.
            xq = xq_ref[...].astype(compute_dtype)               # (tq, Dm)
            q32 = jnp.dot(xq, wq_ref[...], preferred_element_type=jnp.float32)
            qt_sc[...] = (q32 + bq_ref[...]).astype(qt_sc.dtype)
        m_sc[...] = jnp.full(m_sc.shape, -jnp.inf, dtype=jnp.float32)
        l_sc[...] = jnp.zeros(l_sc.shape, dtype=jnp.float32)
        acc_sc[...] = jnp.zeros(acc_sc.shape, dtype=jnp.float32)

    q = qt_sc[...] if fused_q else q_in_ref[...].astype(compute_dtype)  # (tq, Dk)
    k = k_ref[...]                                                      # (tkv, Dk)
    v = v_ref[...]                                                      # (tkv, Dv)

    # Q @ K^T via contraction on the feature axis -- no explicit transpose.
    s = jax.lax.dot_general(
        q, k, dimension_numbers=(((1,), (1,)), ((), ())),
        preferred_element_type=jnp.float32)                             # (tq, tkv)

    if has_kv_mask:
        # (1, tkv) additive bias: 0 for valid keys, -1e30 for padded columns
        # (only the last kv tile carries non-zero entries). Single VPU add.
        s = s + mask_ref[...]

    m_prev = m_sc[...]
    m_new = jnp.maximum(m_prev, jnp.max(s, axis=-1, keepdims=True))
    alpha = jnp.exp(m_prev - m_new)
    p = jnp.exp(s - m_new)
    l_sc[...] = alpha * l_sc[...] + jnp.sum(p, axis=-1, keepdims=True)
    acc_sc[...] = alpha * acc_sc[...] + jnp.dot(
        p.astype(v.dtype), v, preferred_element_type=jnp.float32)
    m_sc[...] = m_new

    @pl.when(ki == pl.num_programs(1) - 1)
    def _finalize():
        inv_l = pl.reciprocal(l_sc[...], approx=True)
        o_ref[...] = (acc_sc[...] * inv_l).astype(o_ref.dtype)


def _flash_attention(q_operands, k, v, mask_bias, *, q_tile, kv_tile,
                     fused_q, compute_dtype, out_dtype):
    B, Sk_p, Kd_p = k.shape
    Vd_p = v.shape[-1]
    if fused_q:
        xq, wq, bq = q_operands
        Sq_p, Dm = xq.shape[1], xq.shape[2]
    else:
        (qp_proj,) = q_operands
        Sq_p = qp_proj.shape[1]
    n_q = Sq_p // q_tile
    n_kv = Sk_p // kv_tile
    has_kv_mask = mask_bias is not None

    in_specs = []
    operands = []
    if fused_q:
        in_specs += [
            pl.BlockSpec((None, q_tile, Dm), lambda i, ki: (i // n_q, i % n_q, 0)),
            pl.BlockSpec((Dm, Kd_p), lambda i, ki: (0, 0)),     # resident scaled wq
            pl.BlockSpec((1, Kd_p), lambda i, ki: (0, 0)),      # resident scaled bq
        ]
        operands += [xq, wq, bq]
    else:
        in_specs += [pl.BlockSpec((None, q_tile, Kd_p),
                                  lambda i, ki: (i // n_q, i % n_q, 0))]
        operands += [qp_proj]
    in_specs += [
        pl.BlockSpec((None, kv_tile, Kd_p), lambda i, ki: (i // n_q, ki, 0)),
        pl.BlockSpec((None, kv_tile, Vd_p), lambda i, ki: (i // n_q, ki, 0)),
    ]
    operands += [k, v]
    if has_kv_mask:
        in_specs += [pl.BlockSpec((1, kv_tile), lambda i, ki: (0, ki))]
        operands += [mask_bias]

    scratch = []
    if fused_q:
        scratch.append(pltpu.VMEM((q_tile, Kd_p), compute_dtype))  # projected Q tile
    scratch += [
        pltpu.VMEM((q_tile, 1), jnp.float32),    # m (running max)
        pltpu.VMEM((q_tile, 1), jnp.float32),    # l (running denom)
        pltpu.VMEM((q_tile, Vd_p), jnp.float32), # acc
    ]

    cdt_size = jnp.dtype(compute_dtype).itemsize
    flops = 2 * B * Sq_p * Sk_p * (Kd_p + Vd_p)
    # K/V are re-streamed from HBM once per q-tile.
    bytes_accessed = (n_q * B * Sk_p * (Kd_p + Vd_p) * cdt_size
                      + B * Sq_p * Vd_p * jnp.dtype(out_dtype).itemsize)
    if fused_q:
        flops += 2 * B * Sq_p * Dm * Kd_p
        bytes_accessed += xq.size * xq.dtype.itemsize + wq.size * wq.dtype.itemsize
    else:
        bytes_accessed += qp_proj.size * qp_proj.dtype.itemsize

    kernel = functools.partial(_flash_kernel, fused_q=fused_q,
                               has_kv_mask=has_kv_mask, compute_dtype=compute_dtype)
    return pl.pallas_call(
        kernel,
        out_shape=jax.ShapeDtypeStruct((B, Sq_p, Vd_p), out_dtype),
        grid_spec=pltpu.PrefetchScalarGridSpec(
            num_scalar_prefetch=0,
            grid=(B * n_q, n_kv),   # flattened (batch, q-tiles) parallel axis
            in_specs=in_specs,
            out_specs=pl.BlockSpec((None, q_tile, Vd_p),
                                   lambda i, ki: (i // n_q, i % n_q, 0)),
            scratch_shapes=scratch,
        ),
        compiler_params=pltpu.CompilerParams(
            dimension_semantics=("parallel", "arbitrary"),
            vmem_limit_bytes=_VMEM_LIMIT,
        ),
        cost_estimate=pl.CostEstimate(
            flops=int(flops),
            transcendentals=int(B * Sq_p * Sk_p),
            bytes_accessed=int(bytes_accessed)),
    )(*operands)


# --------------------------------------------------------------------------- #
# Public wrapper
# --------------------------------------------------------------------------- #
def bidirectional_cross_attention(query, key, value, params, *,
                                  compute_dtype=jnp.bfloat16,
                                  q_tile=512, kv_tile=512,
                                  fuse_q_projection=None):
    """query: (B, Sq, model_dim); key/value: (B, Sk, model_dim).
    params: wq (model_dim, Q_dim), bq (Q_dim,), wk, bk, wv, bv (weights stored
    pre-transposed so y = x @ W + b == PyTorch nn.Linear).
    Returns (B, Sq, V_dim) in query.dtype."""
    B, Sq, Dm = query.shape
    _, Sk, _ = key.shape
    Qd = params["wq"].shape[1]
    Kd = params["wk"].shape[1]
    Vd = params["wv"].shape[1]
    assert Qd == Kd, "Q_dim must equal K_dim for the score matmul"
    assert key.shape == value.shape

    out_dtype = query.dtype
    cdt = jnp.dtype(compute_dtype)

    # Lane-dense padded projection widths; padded weight/bias columns are zero,
    # so padded output columns are exactly zero and get sliced off at the end.
    Kd_p = _round_up(Kd, _LANE)
    Vd_p = _round_up(Vd, _LANE)

    # Adaptive sequence tiles (bounded padding waste).
    q_tile = _pick_tile(Sq, q_tile)
    kv_tile = _pick_tile(Sk, kv_tile)
    Sq_p = _round_up(Sq, q_tile)
    Sk_p = _round_up(Sk, kv_tile)

    def pad_seq(x, s_p):
        if x.shape[1] == s_p:
            return x
        return jnp.pad(x, ((0, 0), (0, s_p - x.shape[1]), (0, 0)))

    def prep_w(w, cols, scale=None):
        if scale is not None:
            w = w * scale
        if w.shape[1] != cols:
            w = jnp.pad(w, ((0, 0), (0, cols - w.shape[1])))
        return w.astype(cdt)

    def prep_b(b, cols, scale=None):
        if scale is not None:
            b = b * scale
        if b.shape[0] != cols:
            b = jnp.pad(b, (0, cols - b.shape[0]))
        return b.reshape(1, cols).astype(jnp.float32)

    # Fold 1/sqrt(K_dim) into the query projection: scale*(xW+b) = x(sW)+(sb).
    scale = 1.0 / math.sqrt(float(Kd))

    qp = pad_seq(query, Sq_p)       # seq padding only; dtype cast happens in-kernel
    kp = pad_seq(key, Sk_p)
    vp = pad_seq(value, Sk_p)

    wq = prep_w(params["wq"], Kd_p, scale); bq = prep_b(params["bq"], Kd_p, scale)
    wk = prep_w(params["wk"], Kd_p);        bk = prep_b(params["bk"], Kd_p)
    wv = prep_w(params["wv"], Vd_p);        bv = prep_b(params["bv"], Vd_p)

    # K / V projections are computed exactly once (never per q-tile), stored in
    # the (bf16) compute dtype so the flash kernel streams half the bytes.
    Kp = _linear(kp, wk, bk, seq_tile=kv_tile, out_dtype=cdt, compute_dtype=cdt)
    Vp = _linear(vp, wv, bv, seq_tile=kv_tile, out_dtype=cdt, compute_dtype=cdt)

    if fuse_q_projection is None:
        fuse_q_projection = Dm * Kd_p * cdt.itemsize <= _FUSE_Q_WEIGHT_LIMIT

    mask_bias = None
    if Sk_p != Sk:
        col = jnp.arange(Sk_p)
        mask_bias = jnp.where(col < Sk, 0.0, _NEG_BIG).astype(jnp.float32)
        mask_bias = mask_bias.reshape(1, Sk_p)

    if fuse_q_projection:
        q_operands = (qp, wq, bq)
    else:
        Qp = _linear(qp, wq, bq, seq_tile=q_tile, out_dtype=cdt, compute_dtype=cdt)
        q_operands = (Qp,)

    out = _flash_attention(q_operands, Kp, Vp, mask_bias,
                           q_tile=q_tile, kv_tile=kv_tile,
                           fused_q=fuse_q_projection,
                           compute_dtype=cdt, out_dtype=out_dtype)
    return out[:, :Sq, :Vd]


def init_params(key, model_dim, Q_dim, K_dim, V_dim, dtype=jnp.float32):
    ks = jax.random.split(key, 6)
    scale = 1.0 / (model_dim ** 0.5)
    return {
        "wq": jax.random.uniform(ks[0], (model_dim, Q_dim), dtype, -1.0, 1.0) * scale,
        "bq": jax.random.uniform(ks[1], (Q_dim,), dtype, -1.0, 1.0) * scale,
        "wk": jax.random.uniform(ks[2], (model_dim, K_dim), dtype, -1.0, 1.0) * scale,
        "bk": jax.random.uniform(ks[3], (K_dim,), dtype, -1.0, 1.0) * scale,
        "wv": jax.random.uniform(ks[4], (model_dim, V_dim), dtype, -1.0, 1.0) * scale,
        "bv": jax.random.uniform(ks[5], (V_dim,), dtype, -1.0, 1.0) * scale,
    }


def _reference(query, key, value, params):
    Q = query @ params["wq"] + params["bq"]
    K = key @ params["wk"] + params["bk"]
    V = value @ params["wv"] + params["bv"]
    s = jnp.einsum("bqd,bkd->bqk", Q, K) / (K.shape[-1] ** 0.5)
    p = jax.nn.softmax(s, axis=-1)
    return jnp.einsum("bqk,bkd->bqd", p, V)


if __name__ == "__main__":
    # Small shapes; Sk and V_dim intentionally differ from Sq/K_dim to exercise
    # the padding + key-mask paths.
    B, Sq, Sk = 2, 8, 12
    model_dim, Q_dim, K_dim, V_dim = 32, 32, 32, 48

    root = jax.random.PRNGKey(0)
    k_params, k_q, k_k, k_v, k_k2, k_v2 = jax.random.split(root, 6)

    params = init_params(k_params, model_dim, Q_dim, K_dim, V_dim)
    query = jax.random.normal(k_q, (B, Sq, model_dim), jnp.float32)
    key_in = jax.random.normal(k_k, (B, Sk, model_dim), jnp.float32)
    value_in = jax.random.normal(k_v, (B, Sk, model_dim), jnp.float32)

    # Path 1: default bf16 compute, fused Q projection, padded-key (mask) path.
    ref = _reference(query, key_in, value_in, params)
    out = bidirectional_cross_attention(query, key_in, value_in, params)
    out = jax.block_until_ready(out)
    assert out.shape == (B, Sq, V_dim)
    assert jnp.allclose(out, ref, atol=3e-2, rtol=3e-2), "bf16 fused path mismatch"

    # Path 2: f32 compute, non-fused Q projection, no key padding (Sk = tile).
    Sk2 = 16
    key2 = jax.random.normal(k_k2, (B, Sk2, model_dim), jnp.float32)
    value2 = jax.random.normal(k_v2, (B, Sk2, model_dim), jnp.float32)
    ref2 = _reference(query, key2, value2, params)
    out2 = bidirectional_cross_attention(query, key2, value2, params,
                                         compute_dtype=jnp.float32,
                                         fuse_q_projection=False)
    out2 = jax.block_until_ready(out2)
    assert out2.shape == (B, Sq, V_dim)
    # tolerance accounts for approx (EUP) reciprocal in the softmax denominator
    assert jnp.allclose(out2, ref2, atol=5e-3, rtol=5e-3), "f32 non-fused path mismatch"

    print("KERNEL_OK")
</pallas_src>

<mosaic_0001>
module attributes {stable_mosaic.version = 11 : i64} {
  func.func @_linear_kernel(%arg0: i32, %arg1: i32, %arg2: i32, %arg3: memref<1x16x32xf32, #tpu.memory_space<vmem>>, %arg4: memref<32x128xbf16, #tpu.memory_space<vmem>>, %arg5: memref<1x128xf32, #tpu.memory_space<vmem>>, %arg6: memref<1x16x128xbf16, #tpu.memory_space<vmem>>) attributes {dimension_semantics = [#tpu.dimension_semantics<parallel>, #tpu.dimension_semantics<parallel>, #tpu.dimension_semantics<parallel>], iteration_bounds = array<i64: 2, 1, 1>, scalar_prefetch = 0 : i64, scratch_operands = 0 : i64, tpu.core_type = #tpu.core_type<tc>, window_params = [{transform_indices = @transform_0, window_bounds = array<i64: 1, 16, 32>}, {transform_indices = @transform_1, window_bounds = array<i64: 32, 128>}, {transform_indices = @transform_2, window_bounds = array<i64: 1, 128>}, {transform_indices = @transform_3, window_bounds = array<i64: 1, 16, 128>}]} {
    %c0 = arith.constant 0 : index
    %c0_0 = arith.constant 0 : index
    %c0_1 = arith.constant 0 : index
    %0 = vector.load %arg3[%c0, %c0_0, %c0_1] : memref<1x16x32xf32, #tpu.memory_space<vmem>>, vector<1x16x32xf32>
    %1 = vector.shape_cast %0 : vector<1x16x32xf32> to vector<16x32xf32>
    %2 = arith.truncf %1 : vector<16x32xf32> to vector<16x32xbf16>
    %c0_2 = arith.constant 0 : index
    %c0_3 = arith.constant 0 : index
    %3 = vector.load %arg4[%c0_2, %c0_3] : memref<32x128xbf16, #tpu.memory_space<vmem>>, vector<32x128xbf16>
    %cst = arith.constant dense<0.000000e+00> : vector<16x128xf32>
    %4 = tpu.matmul %2, %3, %cst {dimension_numbers = #tpu.dot_dimension_numbers<[1], [0], [0], [1], [0, 0, 1, 1], [], []>} : vector<16x32xbf16>, vector<32x128xbf16>, vector<16x128xf32> -> vector<16x128xf32>
    %c0_4 = arith.constant 0 : index
    %c0_5 = arith.constant 0 : index
    %5 = vector.load %arg5[%c0_4, %c0_5] : memref<1x128xf32, #tpu.memory_space<vmem>>, vector<1x128xf32>
    %6 = vector.broadcast %5 : vector<1x128xf32> to vector<16x128xf32>
    %7 = arith.addf %4, %6 : vector<16x128xf32>
    %8 = arith.truncf %7 : vector<16x128xf32> to vector<16x128xbf16>
    %c0_6 = arith.constant 0 : index
    %c0_7 = arith.constant 0 : index
    %c0_8 = arith.constant 0 : index
    %9 = vector.load %arg6[%c0_6, %c0_7, %c0_8] : memref<1x16x128xbf16, #tpu.memory_space<vmem>>, vector<1x16x128xbf16>
    %10 = vector.shape_cast %9 : vector<1x16x128xbf16> to vector<16x128xbf16>
    %11 = vector.shape_cast %8 : vector<16x128xbf16> to vector<1x16x128xbf16>
    tpu.vector_store %arg6[%c0_6, %c0_7, %c0_8], %11 {strides = array<i32>} : memref<1x16x128xbf16, #tpu.memory_space<vmem>>, vector<1x16x128xbf16>,
    return
  }
  func.func @transform_0(%arg0: i32, %arg1: i32, %arg2: i32) -> (i32, i32, i32) {
    %c0_i32 = arith.constant 0 : i32
    %c0_i32_0 = arith.constant 0 : i32
    return %arg0, %arg1, %c0_i32 : i32, i32, i32
  }
  func.func @transform_1(%arg0: i32, %arg1: i32, %arg2: i32) -> (i32, i32) {
    %c0_i32 = arith.constant 0 : i32
    %c0_i32_0 = arith.constant 0 : i32
    return %c0_i32, %arg2 : i32, i32
  }
  func.func @transform_2(%arg0: i32, %arg1: i32, %arg2: i32) -> (i32, i32) {
    %c0_i32 = arith.constant 0 : i32
    %c0_i32_0 = arith.constant 0 : i32
    return %c0_i32, %arg2 : i32, i32
  }
  func.func @transform_3(%arg0: i32, %arg1: i32, %arg2: i32) -> (i32, i32, i32) {
    %c0_i32 = arith.constant 0 : i32
    return %arg0, %arg1, %arg2 : i32, i32, i32
  }
}

</mosaic_0001>

<llo_original>
// kernel: tpu_custom_call.1
$region0: #{tpu_custom_call.1}
  #allocation0 [shape = 'u32[]', space=smem, size = 0x4, offset = 0x4, fixed_abs, tag = 'smem constant byte address 0x4 - core index']
  #allocation1 [shape = 'u32[144,128]{1,0:T(1,128)}', space=vmem, size = 0x12000, scoped, tag = 'internal scratch']
  %s0 = inlined_call_operand.hbm [shape: f32[2,16,32], index: 0, kind: input, shape index: {}]
  %s1 = inlined_call_operand.hbm [shape: bf16[32,128], index: 1, kind: input, shape index: {}]
  %s2 = inlined_call_operand.vmem [shape: f32[1,128], index: 2, kind: input, shape index: {}]
  %s3 = inlined_call_operand.hbm [shape: bf16[2,16,128], index: 3, kind: output, shape index: {}]
  %s4 = sld [smem:[#allocation0]]
  $region53: #{tpu_custom_call.1} parent=0
    _
  %s6 = ssub.s32 1, %s4
  %s7 = scalar_select 0, %s6, %s4
  $region1: #{tpu_custom_call.1} parent=0
    #allocation2 [shape = 'u8[16384]{0}', space=vmem, size = 0x4000, scoped, tag = 'input window, operand 0']
    #allocation3 [shape = 's32[2]{0}', space=sflag, size = 0x8, scoped, tag = 'scoped memory for tpu_custom_call.1']
    #allocation4 [shape = 's32[2]{0}', space=sflag, size = 0x8, scoped, tag = 'scoped memory for tpu_custom_call.1']
    #allocation5 [shape = 'u8[8192]{0}', space=vmem, size = 0x2000, scoped, tag = 'input window, operand 1, single buffered']
    #allocation6 [shape = 's32[1]{0}', space=sflag, size = 0x4, scoped, tag = 'scoped memory for tpu_custom_call.1']
    #allocation7 [shape = 'u8[8192]{0}', space=vmem, size = 0x2000, scoped, tag = 'output window, operand 0']
    %8 = vsyncpa [#allocation3], 0
    %s9 = scalar_lea.sflag [#allocation3], 1
    %10 = vsyncpa %s9, 0
    %11 = vsyncpa [#allocation6], 0
    %12 = vsyncpa [#allocation4], 0
    %s13 = scalar_lea.sflag [#allocation4], 1
    %14 = vsyncpa %s13, 0
    loop: start=0, step=1, limit=4
    $region2: #{tpu_custom_call.1} parent=1 // loop_pre_header
      _
    $region3: #{tpu_custom_call.1} parent=1 // loop_header
      %s16 = sphi 0, %s20
      %p17 = scmp.ge.s32.totalorder %s16, 4
      %s23 = sphi 0, %s42
      %s24 = sphi 0, %s38
      %s25 = sphi 0, %s34
      %s26 = sphi 0, %s23
      %s27 = sphi 0, %s24
      %s28 = sphi 0, %s25
      %s29 = sphi 0, %s26
      %s30 = sphi 0, %s27
      %s31 = sphi 0, %s28
      %s47 = sphi 0, %s49
      %s50 = sphi 0, %s47
      %s51 = sphi 0, %s50
      %s67 = sphi 0, %s51
      %s73 = sphi 0, %s75
      %s76 = sphi 0, %s73
      %s77 = sphi 0, %s76
      %s93 = sphi 0, %s77
      %s99 = sphi 0, %s101
      %s102 = sphi 0, %s99
      %s103 = sphi 0, %s102
      %s119 = sphi 0, %s103
      %s129 = sphi 0, %s131
      %s132 = sphi 0, %s129
      %s133 = sphi 0, %s132
      %s149 = sphi 0, %s133
    $region4: #{tpu_custom_call.1} parent=1 // loop_header_branch
      %19 = sbr.rel (%p17) target = $region8
    $region5: #{tpu_custom_call.1} parent=1 // loop_body
      %s21 = ssub.s32 %s16, 1
      %s22 = ssub.s32 %s16, 2
      %s32 = sadd.s32 1, %s25
      %p33 = scmp.ge.s32.totalorder %s32, 1
      %s34 = scalar_select %p33, 0, %s32
      %s35 = sadd.s32 1, %s24
      %s36 = scalar_select %p33, %s35, %s24
      %p37 = scmp.ge.s32.totalorder %s36, 1
      %s38 = scalar_select %p37, 0, %s36
      %s39 = sadd.s32 1, %s23
      %s40 = scalar_select %p37, %s39, %s23
      %p41 = scmp.ge.s32.totalorder %s40, 2
      %s42 = scalar_select %p41, 0, %s40
      %s43 = ssub.s32 %s23, %s42
      %s44 = ssub.s32 %s24, %s38
      %s45 = sor.u32 %s43, %s44
      %p46 = scmp.eq.s32.totalorder %s45, 0
      %s48 = sadd.s32 %s47, 1
      %s49 = scalar_select %p46, %s47, %s48
      %p52 = pneg %p46
      %p53 = scmp.eq.s32.totalorder %s16, 1
      %p54 = por %p52, %p53
      %p55 = scmp.ne.s32.totalorder %s47, %s50
      %p56 = scmp.eq.s32.totalorder %s16, 0
      %p57 = por %p55, %p56
      %p58 = scmp.ne.s32.totalorder %s47, %s50
      %p59 = scmp.eq.s32.totalorder %s21, 1
      %p60 = por %p58, %p59
      %p61 = scmp.ne.s32.totalorder %s50, %s51
      %p62 = scmp.eq.s32.totalorder %s21, 0
      %p63 = por %p61, %p62
      %p64 = scmp.ne.s32.totalorder %s50, %s51
      %p65 = scmp.eq.s32.totalorder %s22, 1
      %p66 = por %p64, %p65
      %p68 = scmp.ne.s32.totalorder %s51, %s67
      %p69 = scmp.eq.s32.totalorder %s22, 0
      %p70 = por %p68, %p69
      %s71 = ssub.s32 %s25, %s34
      %p72 = scmp.eq.s32.totalorder %s71, 0
      %s74 = sadd.s32 %s73, 1
      %s75 = scalar_select %p72, %s73, %s74
      %p78 = pneg %p72
      %p79 = scmp.eq.s32.totalorder %s16, 1
      %p80 = por %p78, %p79
      %p81 = scmp.ne.s32.totalorder %s73, %s76
      %p82 = scmp.eq.s32.totalorder %s16, 0
      %p83 = por %p81, %p82
      %p84 = scmp.ne.s32.totalorder %s73, %s76
      %p85 = scmp.eq.s32.totalorder %s21, 1
      %p86 = por %p84, %p85
      %p87 = scmp.ne.s32.totalorder %s76, %s77
      %p88 = scmp.eq.s32.totalorder %s21, 0
      %p89 = por %p87, %p88
      %p90 = scmp.ne.s32.totalorder %s76, %s77
      %p91 = scmp.eq.s32.totalorder %s22, 1
      %p92 = por %p90, %p91
      %p94 = scmp.ne.s32.totalorder %s77, %s93
      %p95 = scmp.eq.s32.totalorder %s22, 0
      %p96 = por %p94, %p95
      %s97 = ssub.s32 %s25, %s34
      %p98 = scmp.eq.s32.totalorder %s97, 0
      %s100 = sadd.s32 %s99, 1
      %s101 = scalar_select %p98, %s99, %s100
      %p104 = pneg %p98
      %p105 = scmp.eq.s32.totalorder %s16, 1
      %p106 = por %p104, %p105
      %p107 = scmp.ne.s32.totalorder %s99, %s102
      %p108 = scmp.eq.s32.totalorder %s16, 0
      %p109 = por %p107, %p108
      %p110 = scmp.ne.s32.totalorder %s99, %s102
      %p111 = scmp.eq.s32.totalorder %s21, 1
      %p112 = por %p110, %p111
      %p113 = scmp.ne.s32.totalorder %s102, %s103
      %p114 = scmp.eq.s32.totalorder %s21, 0
      %p115 = por %p113, %p114
      %p116 = scmp.ne.s32.totalorder %s102, %s103
      %p117 = scmp.eq.s32.totalorder %s22, 1
      %p118 = por %p116, %p117
      %p120 = scmp.ne.s32.totalorder %s103, %s119
      %p121 = scmp.eq.s32.totalorder %s22, 0
      %p122 = por %p120, %p121
      %s123 = ssub.s32 %s23, %s42
      %s124 = ssub.s32 %s24, %s38
      %s125 = sor.u32 %s123, %s124
      %s126 = ssub.s32 %s25, %s34
      %s127 = sor.u32 %s125, %s126
      %p128 = scmp.eq.s32.totalorder %s127, 0
      %s130 = sadd.s32 %s129, 1
      %s131 = scalar_select %p128, %s129, %s130
      %p134 = pneg %p128
      %p135 = scmp.eq.s32.totalorder %s16, 1
      %p136 = por %p134, %p135
      %p137 = scmp.ne.s32.totalorder %s129, %s132
      %p138 = scmp.eq.s32.totalorder %s16, 0
      %p139 = por %p137, %p138
      %p140 = scmp.ne.s32.totalorder %s129, %s132
      %p141 = scmp.eq.s32.totalorder %s21, 1
      %p142 = por %p140, %p141
      %p143 = scmp.ne.s32.totalorder %s132, %s133
      %p144 = scmp.eq.s32.totalorder %s21, 0
      %p145 = por %p143, %p144
      %p146 = scmp.ne.s32.totalorder %s132, %s133
      %p147 = scmp.eq.s32.totalorder %s22, 1
      %p148 = por %p146, %p147
      %p150 = scmp.ne.s32.totalorder %s133, %s149
      %p151 = scmp.eq.s32.totalorder %s22, 0
      %p152 = por %p150, %p151
      %p153 = scmp.le.s32.totalorder 1, %s16
      %p154 = scmp.lt.s32.totalorder %s16, 3
      %p155 = pnand %p153, %p154
      %p156 = pneg %p155
      // Predicated region
      $region9: #{tpu_custom_call.1} parent=5 // pred_check
        _
      $region10: #{tpu_custom_call.1} parent=5 // pred_check_branch
        %158 = sbr.rel (%p155) target = $region12
      $region11: #{tpu_custom_call.1} parent=5 // pred_region
        %s159 = ssub.s32 %s16, 1
        // Predicated region
        $region13: #{tpu_custom_call.1} parent=11 // pred_check
          %p160 = pneg %p89
        $region14: #{tpu_custom_call.1} parent=11 // pred_check_branch
          %162 = sbr.rel (%p160) target = $region16
        $region15: #{tpu_custom_call.1} parent=11 // pred_region
          %s164 = ssub.s32 256, 256
          %165 = vsyncadd [#allocation6], %s164
          %s166 = smul.addr %s28, 64
          %s167 = scalar_lea.hbm %s1, %s166
          %s168 = sshll.u32 [#allocation5], 4
          %s169 = int_to_ptr.vmem [resolvable:$true] %s168
          %174 = dma.hbm_to_vmem [thread:$0]  %s167, 256, %s169, [#allocation6], 64, 64, 4
        $region16: #{tpu_custom_call.1} parent=11 // pred_fallthru
          _
        // Predicated region
        $region17: #{tpu_custom_call.1} parent=11 // pred_check
          %p175 = pneg %p115
        $region18: #{tpu_custom_call.1} parent=11 // pred_check_branch
          %177 = sbr.rel (%p175) target = $region20
        $region19: #{tpu_custom_call.1} parent=11 // pred_region
          %p178 = scmp.lt.s32.totalorder %s28, 0
          %s179 = scalar_select %p178, %s28, 0
          %s180 = scalar_lea.vmem %s2, %s179
        $region20: #{tpu_custom_call.1} parent=11 // pred_fallthru
          _
      $region12: #{tpu_custom_call.1} parent=5 // pred_fallthru
        _
      %p181 = scmp.lt.s32.totalorder %s16, 2
      // Predicated region
      $region21: #{tpu_custom_call.1} parent=5 // pred_check
        %p182 = pneg %p181
      $region22: #{tpu_custom_call.1} parent=5 // pred_check_branch
        %184 = sbr.rel (%p182) target = $region24
      $region23: #{tpu_custom_call.1} parent=5 // pred_region
        // Predicated region
        $region25: #{tpu_custom_call.1} parent=23 // pred_check
          %p185 = pneg %p57
        $region26: #{tpu_custom_call.1} parent=23 // pred_check_branch
          %187 = sbr.rel (%p185) target = $region28
        $region27: #{tpu_custom_call.1} parent=23 // pred_region
          %s188 = sand.u32 %s47, 1
          %s189 = scalar_lea.sflag [#allocation3], %s188
          %s190 = sand.u32 %s47, 1
          %s191 = smul.addr %s190, 16
          %s192 = scalar_lea.vmem [#allocation2], %s191
          %s193 = smul.u32 2, %s24
          %s195 = ssub.s32 256, 256
          %196 = vsyncadd %s189, %s195
          %s197 = smul.addr %s23, 2
          %s198 = sadd.s32 %s193, %s197
          %s199 = smul.addr %s198, 128
          %s200 = scalar_lea.hbm %s0, %s199
          %s201 = sshll.u32 %s192, 4
          %s202 = int_to_ptr.vmem [resolvable:$true] %s201
          %207 = dma.hbm_to_vmem [thread:$0]  %s200, 256, %s202, %s189, 128, 128, 8
        $region28: #{tpu_custom_call.1} parent=23 // pred_fallthru
          _
      $region24: #{tpu_custom_call.1} parent=5 // pred_fallthru
        _
      %p208 = scmp.le.s32.totalorder 1, %s16
      %p209 = scmp.lt.s32.totalorder %s16, 3
      %p210 = pnand %p208, %p209
      %p211 = pneg %p210
      // Predicated region
      $region29: #{tpu_custom_call.1} parent=5 // pred_check
        _
      $region30: #{tpu_custom_call.1} parent=5 // pred_check_branch
        %213 = sbr.rel (%p210) target = $region32
      $region31: #{tpu_custom_call.1} parent=5 // pred_region
        %s214 = ssub.s32 %s16, 1
        %s215 = sand.u32 %s50, 1
        %s216 = scalar_lea.sflag [#allocation3], %s215
        %s217 = sand.u32 %s50, 1
        %s218 = smul.addr %s217, 16
        %s219 = scalar_lea.vmem [#allocation2], %s218
        // Predicated region
        $region33: #{tpu_custom_call.1} parent=31 // pred_check
          %p220 = pneg %p63
        $region34: #{tpu_custom_call.1} parent=31 // pred_check_branch
          %222 = sbr.rel (%p220) target = $region36
        $region35: #{tpu_custom_call.1} parent=31 // pred_region
          %223 = dma.done %s216, 256
        $region36: #{tpu_custom_call.1} parent=31 // pred_fallthru
          _
        // Predicated region
        $region37: #{tpu_custom_call.1} parent=31 // pred_check
          %p224 = pneg %p89
        $region38: #{tpu_custom_call.1} parent=31 // pred_check_branch
          %226 = sbr.rel (%p224) target = $region40
        $region39: #{tpu_custom_call.1} parent=31 // pred_region
          %227 = dma.done [#allocation6], 256
        $region40: #{tpu_custom_call.1} parent=31 // pred_fallthru
          _
        %s228 = sand.u32 %s50, 1
        %s229 = scalar_lea.sflag [#allocation3], %s228
        %s230 = sand.u32 %s50, 1
        %s231 = smul.addr %s230, 16
        %s232 = scalar_lea.vmem [#allocation2], %s231
        %p233 = pneg %p63
        %p234 = pneg %p60
        %p235 = pneg %p89
        %p236 = pneg %p86
        %p237 = scmp.lt.s32.totalorder %s28, 0
        %s238 = scalar_select %p237, %s28, 0
        %s239 = scalar_lea.vmem %s2, %s238
        %p240 = pneg %p115
        %p241 = pneg %p112
        %p242 = pneg %p145
        %p243 = pneg %p142
        %s244 = sand.u32 %s132, 1
        %s245 = scalar_lea.sflag [#allocation4], %s244
        %s246 = sand.u32 %s132, 1
        %s247 = smul.addr %s246, 8
        %s248 = scalar_lea.vmem [#allocation7], %s247
        %s249 = smul.u32 2, %s27
        %p250 = scmp.lt.s32.totalorder %s28, 0
        %s251 = scalar_select %p250, %s28, 0
        %s252 = scalar_lea.vmem %s2, %s251
        %s253 = smul.u32 2, %s27
        %v255 = vld [vmem:[%s219] sm:$0xff]
        %v256 = vld [vmem:[%s219 + $0x8] sm:$0xff]
        %v257 = vpack.c.bf16 %v256, %v255
        %v258 = vld [vmem:[#allocation5] sm:$0xf]
        %v259 = vld [vmem:[#allocation5 + $0x4] sm:$0xf]
        %v260 = vld [vmem:[#allocation5 + $0x8] sm:$0xf]
        %v261 = vld [vmem:[#allocation5 + $0xc] sm:$0xf]
        %v262 = vld [vmem:[%s252] sm:$0x1]
        %v264 = vlaneseq
        %v265 = vshrl.u32 %v264, 7
        %v266 = vsub.s32 0, %v265
        %v267 = vrot.slane %v262, %v266
        %v273 = vunpack.c.l.b16 %v258
        %v274 = vunpack.c.l.b16 %v259
        %v275 = vunpack.c.l.b16 %v260
        %v276 = vunpack.c.l.b16 %v261
        %v277 = vpack.c.b16 %v274, %v273
        %v278 = vpack.c.b16 %v276, %v275
        %vm281 = vcmask 261120
        %v283 = vsel %vm281, %v257, 0
        %285 = vmatprep.subr.bf16.mxu0 0
        %286 = vmatpush1.bf16.msra.mxu0 0
        %287 = vmatprep.subr.bf16.mxu0 0
        %288 = vmatpush1.bf16.msra.mxu0 0
        %289 = vmatprep.subr.bf16.mxu0 0
        %290 = vmatpush1.bf16.msra.mxu0 0
        %291 = vmatprep.subr.bf16.mxu0 0
        %292 = vmatpush1.bf16.msra.mxu0 0
        %293 = vmatprep.subr.bf16.mxu0 0
        %294 = vmatpush1.bf16.msra.mxu0 0
        %295 = vmatprep.subr.bf16.mxu0 0
        %296 = vmatpush1.bf16.msra.mxu0 0
        %297 = vmatprep.subr.bf16.mxu0 0
        %298 = vmatpush1.bf16.msra.mxu0 %v278
        %299 = vmatprep.subr.bf16.mxu0 0
        %300 = vmatpush1.bf16.msra.mxu0 %v277
        %301 = vmatprep.subr.bf16.mxu0 0
        %302 = vmatpush2.bf16.msra.mxu0 0
        %303 = vmatprep.subr.bf16.mxu0 0
        %304 = vmatpush2.bf16.msra.mxu0 0
        %305 = vmatprep.subr.bf16.mxu0 0
        %306 = vmatpush2.bf16.msra.mxu0 0
        %307 = vmatprep.subr.bf16.mxu0 0
        %308 = vmatpush2.bf16.msra.mxu0 0
        %309 = vmatprep.subr.bf16.mxu0 0
        %310 = vmatpush2.bf16.msra.mxu0 0
        %311 = vmatprep.subr.bf16.mxu0 0
        %312 = vmatpush2.bf16.msra.mxu0 0
        %313 = vmatprep.subr.bf16.mxu0 0
        %314 = vmatpush2.bf16.msra.mxu0 0
        %315 = vmatprep.subr.bf16.mxu0 0
        %316 = vmatpush2.bf16.msra.mxu0 0
        %317 = vmatprep.mubr.bf16.mxu0 0
        %318 = vmatmul.mubr.bf16.gmra.mxu0 %v283
        %v319 = vpop.f32.mrf.mxu0
        %v320 = vadd.f32 %v267, %v319
        %v321 = vpop.f32.mrf.mxu0
        %v322 = vpop.f32.mrf.mxu0
        %v323 = vadd.f32 %v267, %v322
        %v324 = vpop.f32.mrf.mxu0
        %325 = vdwg.mxu0
        %v326 = vpack.c.bf16 %v323, %v320
        %v328 = vunpack.c.l.b16 %v326
        %v329 = vunpack.c.h.b16 %v326
        %v330 = vpack.c.b16 %v328, %v328
        %v331 = vpack.c.b16 %v329, %v329
        %334 = vst [vmem:[%s248] sm:$0xf] %v330
        %335 = vst [vmem:[%s248 + $0x4] sm:$0xf] %v331
        %s336 = sand.u32 %s132, 1
        %s337 = scalar_lea.sflag [#allocation4], %s336
        %s338 = sand.u32 %s132, 1
        %s339 = smul.addr %s338, 8
        %s340 = scalar_lea.vmem [#allocation7], %s339
        // Predicated region
        $region41: #{tpu_custom_call.1} parent=31 // pred_check
          %p341 = pneg %p142
        $region42: #{tpu_custom_call.1} parent=31 // pred_check_branch
          %343 = sbr.rel (%p341) target = $region44
        $region43: #{tpu_custom_call.1} parent=31 // pred_region
          %s344 = smul.u32 2, %s27
          %s346 = ssub.s32 128, 128
          %347 = vsyncadd %s337, %s346
          %s348 = sadd.s32 %s28, %s344
          %s349 = smul.addr %s26, 2
          %s350 = sadd.s32 %s348, %s349
          %s351 = smul.addr %s350, 64
          %s352 = scalar_lea.hbm %s3, %s351
          %s353 = sshll.u32 %s340, 4
          %s354 = int_to_ptr.vmem [resolvable:$true] %s353
          %359 = dma.vmem_to_hbm [thread:$0]  %s354, 128, %s352, %s337, 64, 64, 4
        $region44: #{tpu_custom_call.1} parent=31 // pred_fallthru
          _
      $region32: #{tpu_custom_call.1} parent=5 // pred_fallthru
        _
      %p360 = scmp.le.s32.totalorder 2, %s16
      // Predicated region
      $region45: #{tpu_custom_call.1} parent=5 // pred_check
        %p361 = pneg %p360
      $region46: #{tpu_custom_call.1} parent=5 // pred_check_branch
        %363 = sbr.rel (%p361) target = $region48
      $region47: #{tpu_custom_call.1} parent=5 // pred_region
        %s364 = ssub.s32 %s16, 2
        // Predicated region
        $region49: #{tpu_custom_call.1} parent=47 // pred_check
          %p365 = pneg %p148
        $region50: #{tpu_custom_call.1} parent=47 // pred_check_branch
          %367 = sbr.rel (%p365) target = $region52
        $region51: #{tpu_custom_call.1} parent=47 // pred_region
          %s368 = sand.u32 %s133, 1
          %s369 = scalar_lea.sflag [#allocation4], %s368
          %s370 = sand.u32 %s133, 1
          %s371 = smul.addr %s370, 8
          %s372 = scalar_lea.vmem [#allocation7], %s371
          %373 = dma.done %s369, 128
        $region52: #{tpu_custom_call.1} parent=47 // pred_fallthru
          _
      $region48: #{tpu_custom_call.1} parent=5 // pred_fallthru
        _
    $region6: #{tpu_custom_call.1} parent=1 // loop_footer
      %s20 = sadd.s32 1, %s16
    $region7: #{tpu_custom_call.1} parent=1 // loop_footer_branch
      %15 = sbr.rel target = $region3
    $region8: #{tpu_custom_call.1} parent=1 // loop_exit
      _
    %374 = vsyncpa [#allocation3], 1
    %s375 = scalar_lea.sflag [#allocation3], 1
    %376 = vsyncpa %s375, 1
    %377 = vsyncpa [#allocation6], 1
    %378 = vsyncpa [#allocation4], 1
    %s379 = scalar_lea.sflag [#allocation4], 1
    %380 = vsyncpa %s379, 1

</llo_original>
